<compile_context>
chip_gen: v5e
topology: v5e:2x2
jax: 0.10.0
libtpu: 0.0.40
codegen_flags: <defaults>
</compile_context>

<pallas_src>
import functools

import jax
import jax.numpy as jnp
from jax.experimental import pallas as pl
from jax.experimental.pallas import tpu as pltpu


def _round_up(x: int, m: int) -> int:
    return ((x + m - 1) // m) * m


@functools.lru_cache(maxsize=1)
def _vmem_plan():
    """Per-generation planning numbers: (autosize budget, declared limit cap, 2-TC chip?)."""
    try:
        kind = jax.devices()[0].device_kind.lower()
    except Exception:  # pragma: no cover
        kind = ""
    if ("v5" in kind) or ("v6" in kind):
        # 128 MiB physical VMEM, single TensorCore per chip.
        return (96 << 20), (110 << 20), False
    # v7x (and unknown generations, conservatively): 64 MiB VMEM per TC, 2 TCs/chip.
    return (40 << 20), (48 << 20), True


# --------------------------------- kernels ----------------------------------

def _ffn_kernel_resident(x_ref, w1_ref, b1_ref, w2_ref, b2_ref, o_ref):
    # Whole H2 contraction in one invocation; weight blocks are grid-invariant,
    # so they stay VMEM-resident across the m grid.
    h = jnp.dot(x_ref[...], w1_ref[...], preferred_element_type=jnp.float32)
    h = jnp.maximum(h + b1_ref[...], 0.0)
    y = jnp.dot(h.astype(w2_ref.dtype), w2_ref[...],
                preferred_element_type=jnp.float32)
    o_ref[...] = (y + b2_ref[...]).astype(o_ref.dtype)


def _ffn_kernel_tiled(x_ref, w1_ref, b1_ref, w2_ref, b2_ref, o_ref, acc_ref):
    # Grid: (m_tiles, k_tiles); k tiles the expansion (H2) dimension.
    k = pl.program_id(1)

    @pl.when(k == 0)
    def _init():
        acc_ref[...] = jnp.zeros_like(acc_ref)

    # First 1x1 conv chunk: (block_m, H) @ (H, block_k), bias + ReLU in f32.
    h = jnp.dot(x_ref[...], w1_ref[...], preferred_element_type=jnp.float32)
    h = jnp.maximum(h + b1_ref[...], 0.0)

    # Second 1x1 conv partial reduction: accumulate in f32.
    acc_ref[...] += jnp.dot(h.astype(w2_ref.dtype), w2_ref[...],
                            preferred_element_type=jnp.float32)

    @pl.when(k == pl.num_programs(1) - 1)
    def _finalize():
        o_ref[...] = (acc_ref[...] + b2_ref[...]).astype(o_ref.dtype)


# --------------------------------- wrapper ----------------------------------

@jax.jit
def _ffn_forward_2d(x2d, w1p, b1p, w2p, b2p):
    """x2d: (M, H) raw; w1p/(b1p)/w2p/(b2p): pre-padded, pre-cast parameters."""
    M, H = x2d.shape
    H_pad, H2_pad = w1p.shape
    compute_dtype = w1p.dtype
    out_dtype = x2d.dtype
    in_sz = jnp.dtype(compute_dtype).itemsize
    out_sz = jnp.dtype(out_dtype).itemsize

    budget, limit_cap, two_cores = _vmem_plan()

    # x layout prep: one fused cast(+pad) pass; skipped entirely when H is
    # already lane-aligned and x is already the compute dtype.  No M padding:
    # Pallas masks the ragged last m-tile's writes, and garbage rows there only
    # feed output rows that are never written (row-wise independent math).
    if x2d.dtype != compute_dtype:
        x2d = x2d.astype(compute_dtype)
    if H_pad != H:
        x2d = jnp.pad(x2d, ((0, 0), (0, H_pad - H)))

    # Both weight slabs, double-buffered by the pipeline.  (pl.Buffered(1) on
    # the grid-invariant specs would drop the second buffer and roughly double
    # the residency threshold; left at the default to stay conservative.)
    w_bytes = 2 * (2 * H_pad * H2_pad * in_sz) + 2 * (H2_pad + H_pad) * 4

    def resident_vmem(bm):
        return (w_bytes
                + 2 * bm * H_pad * in_sz        # x tile (double-buffered)
                + 2 * bm * H_pad * out_sz       # out tile (double-buffered)
                + bm * H2_pad * (4 + in_sz))    # f32 h + compute-dtype copy

    def tiled_vmem(bm, bk):
        return (2 * bm * H_pad * in_sz          # x tile
                + 2 * H_pad * bk * in_sz        # w1 tile
                + 2 * bk * 4                    # b1 tile (f32)
                + 2 * bk * H_pad * in_sz        # w2 tile
                + 2 * H_pad * 4                 # b2
                + 2 * bm * H_pad * out_sz       # out tile
                + bm * H_pad * 4                # f32 accumulator scratch
                + bm * bk * (4 + in_sz))        # f32 h + compute-dtype copy

    m8 = _round_up(max(M, 1), 8)
    target_m = 1024 if two_cores else 2048      # big row tiles on 128-MiB chips
    block_m = min(target_m, m8)

    use_resident = resident_vmem(min(block_m, 256)) <= budget

    block_k = None
    if use_resident:
        while block_m > 8 and resident_vmem(block_m) > budget:
            block_m //= 2
    else:
        # Keep the contraction depth of the 2nd matmul >= 256 (fills a 256-wide
        # MXU on v6e/v7x); H2_pad is always a multiple of 256.
        block_k = 512 if (H2_pad % 512 == 0) else 256
        while block_k > 128 and tiled_vmem(8, block_k) > budget:
            block_k //= 2
        while block_m > 8 and tiled_vmem(block_m, block_k) > budget:
            block_m //= 2
    block_m = max(8, (block_m // 8) * 8)

    # v7x: 2 TensorCores per chip share the "parallel" m axis; make it >= 2 tiles.
    if two_cores and block_m >= M and M > 8:
        block_m = max(8, _round_up((M + 1) // 2, 8))

    grid_m = -(-M // block_m)
    flops = 4 * M * H_pad * H2_pad

    if use_resident:
        grid = (grid_m,)
        in_specs = [
            pl.BlockSpec((block_m, H_pad), lambda i: (i, 0)),    # x tile
            pl.BlockSpec((H_pad, H2_pad), lambda i: (0, 0)),     # w1 (resident)
            pl.BlockSpec((1, H2_pad), lambda i: (0, 0)),         # b1 (resident)
            pl.BlockSpec((H2_pad, H_pad), lambda i: (0, 0)),     # w2 (resident)
            pl.BlockSpec((1, H_pad), lambda i: (0, 0)),          # b2 (resident)
        ]
        out_specs = pl.BlockSpec((block_m, H_pad), lambda i: (i, 0))
        scratch_shapes = []
        kernel = _ffn_kernel_resident
        dim_sem = ("parallel",)
        vmem_needed = resident_vmem(block_m)
        bytes_accessed = (M * H_pad * (in_sz + out_sz)            # x + out once
                          + 2 * H_pad * H2_pad * in_sz            # weights once
                          + (H2_pad + H_pad) * 4)
    else:
        grid = (grid_m, H2_pad // block_k)
        in_specs = [
            pl.BlockSpec((block_m, H_pad), lambda i, k: (i, 0)),  # x tile
            pl.BlockSpec((H_pad, block_k), lambda i, k: (0, k)),  # w1 tile
            pl.BlockSpec((1, block_k), lambda i, k: (0, k)),      # b1 tile
            pl.BlockSpec((block_k, H_pad), lambda i, k: (k, 0)),  # w2 tile
            pl.BlockSpec((1, H_pad), lambda i, k: (0, 0)),        # b2
        ]
        out_specs = pl.BlockSpec((block_m, H_pad), lambda i, k: (i, 0))
        # TODO(synk): for f32 outputs the accumulation could go straight into
        # o_ref (its block index is k-invariant) and drop this scratch.
        scratch_shapes = [pltpu.VMEM((block_m, H_pad), jnp.float32)]
        kernel = _ffn_kernel_tiled
        dim_sem = ("parallel", "arbitrary")
        vmem_needed = tiled_vmem(block_m, block_k)
        bytes_accessed = (M * H_pad * (in_sz + out_sz)
                          + grid_m * 2 * H_pad * H2_pad * in_sz   # re-streamed per m-tile
                          + (H2_pad + H_pad) * 4)

    vmem_limit = int(min(limit_cap,
                         max(32 << 20, int(vmem_needed * 1.2) + (4 << 20))))

    out2d = pl.pallas_call(
        kernel,
        out_shape=jax.ShapeDtypeStruct((M, H_pad), out_dtype),
        grid_spec=pltpu.PrefetchScalarGridSpec(
            num_scalar_prefetch=0,
            grid=grid,
            in_specs=in_specs,
            out_specs=out_specs,
            scratch_shapes=scratch_shapes,
        ),
        compiler_params=pltpu.CompilerParams(
            dimension_semantics=dim_sem,
            vmem_limit_bytes=vmem_limit,
        ),
        cost_estimate=pl.CostEstimate(flops=int(flops), transcendentals=0,
                                      bytes_accessed=int(bytes_accessed)),
    )(x2d, w1p, b1p, w2p, b2p)

    if H_pad != H:
        out2d = out2d[:, :H]
    return out2d


class PositionWiseFeedForward:
    """Pallas TPU equivalent of the PyTorch module's forward.

    w1: (H, 2H)  = conv1.weight[:, :, 0].T     b1: (2H,)
    w2: (2H, H)  = conv2.weight[:, :, 0].T     b2: (H,)
    Weights are padded and cast to the MXU compute dtype ONCE here (not per call).
    """

    def __init__(self, w1, b1, w2, b2, *, compute_dtype=jnp.bfloat16):
        w1 = jnp.asarray(w1); b1 = jnp.asarray(b1)
        w2 = jnp.asarray(w2); b2 = jnp.asarray(b2)
        H, H2 = w1.shape
        assert w2.shape == (H2, H) and b1.shape == (H2,) and b2.shape == (H,)
        self.hidden_size = H
        H_pad = _round_up(H, 128)     # lane-dense output / MXU N
        H2_pad = _round_up(H2, 256)   # >=256 contraction depth for the 2nd matmul
        self._w1p = jnp.pad(w1.astype(compute_dtype),
                            ((0, H_pad - H), (0, H2_pad - H2)))
        self._w2p = jnp.pad(w2.astype(compute_dtype),
                            ((0, H2_pad - H2), (0, H_pad - H)))
        self._b1p = jnp.pad(b1.astype(jnp.float32), (0, H2_pad - H2)).reshape(1, H2_pad)
        self._b2p = jnp.pad(b2.astype(jnp.float32), (0, H_pad - H)).reshape(1, H_pad)

    def __call__(self, x):
        B, L, H = x.shape
        assert H == self.hidden_size
        out2d = _ffn_forward_2d(x.reshape(B * L, H),
                                self._w1p, self._b1p, self._w2p, self._b2p)
        return out2d.reshape(B, L, H)


def position_wise_feed_forward(x, w1, b1, w2, b2):
    """Functional convenience wrapper (prefers the class for repeated calls)."""
    return PositionWiseFeedForward(w1, b1, w2, b2)(x)


# ----------------------------- reference & tests -----------------------------

def _reference(x, w1, b1, w2, b2, compute_dtype=jnp.bfloat16):
    # Mirrors the kernel numerics: bf16 MXU inputs, f32 accumulation,
    # f32 bias/ReLU, bf16 re-cast of the activation before the 2nd matmul.
    xc = x.astype(compute_dtype)
    h = jnp.einsum("blh,hf->blf", xc, w1.astype(compute_dtype),
                   preferred_element_type=jnp.float32)
    h = jnp.maximum(h + b1.astype(jnp.float32), 0.0)
    y = jnp.einsum("blf,fh->blh", h.astype(compute_dtype), w2.astype(compute_dtype),
                   preferred_element_type=jnp.float32) + b2.astype(jnp.float32)
    return y.astype(x.dtype)


def _run_case(B, L, H, case):
    H2 = 2 * H
    key = jax.random.fold_in(jax.random.PRNGKey(0), case)
    kx, kw1, kb1, kw2, kb2 = jax.random.split(key, 5)

    x = jax.random.normal(kx, (B, L, H), dtype=jnp.float32)
    # Shapes match nn.Conv1d(H, 2H, 1) / nn.Conv1d(2H, H, 1) weights, squeezed
    # over the kernel dim and pre-transposed for x @ W.
    w1 = jax.random.normal(kw1, (H, H2), dtype=jnp.float32) * (1.0 / jnp.sqrt(H))
    b1 = jax.random.normal(kb1, (H2,), dtype=jnp.float32) * 0.02
    w2 = jax.random.normal(kw2, (H2, H), dtype=jnp.float32) * (1.0 / jnp.sqrt(H2))
    b2 = jax.random.normal(kb2, (H,), dtype=jnp.float32) * 0.02

    ffn = PositionWiseFeedForward(w1, b1, w2, b2)
    out = jax.block_until_ready(ffn(x))

    ref = _reference(x, w1, b1, w2, b2)
    assert out.shape == (B, L, H)
    assert jnp.allclose(out, ref, atol=1e-2, rtol=1e-2), (
        f"mismatch vs reference for shape {(B, L, H)}; "
        f"max abs err={float(jnp.max(jnp.abs(out - ref)))}")


if __name__ == "__main__":
    # Toy shape from the module spec (hidden=32): exercises lane padding 32->128
    # and the resident-weight path.
    _run_case(B=2, L=8, H=32, case=0)
    # Lane-aligned shape: exercises the no-pad x path.
    _run_case(B=2, L=24, H=128, case=1)
    print("KERNEL_OK")
</pallas_src>

<mosaic_0001>
module attributes {stable_mosaic.version = 11 : i64} {
  func.func @_ffn_kernel_resident(%arg0: i32, %arg1: memref<8x128xbf16, #tpu.memory_space<vmem>>, %arg2: memref<128x256xbf16, #tpu.memory_space<vmem>>, %arg3: memref<1x256xf32, #tpu.memory_space<vmem>>, %arg4: memref<256x128xbf16, #tpu.memory_space<vmem>>, %arg5: memref<1x128xf32, #tpu.memory_space<vmem>>, %arg6: memref<8x128xf32, #tpu.memory_space<vmem>>) attributes {dimension_semantics = [#tpu.dimension_semantics<parallel>], iteration_bounds = array<i64: 2>, scalar_prefetch = 0 : i64, scratch_operands = 0 : i64, tpu.core_type = #tpu.core_type<tc>, window_params = [{transform_indices = @transform_0, window_bounds = array<i64: 8, 128>}, {pipeline_mode = #tpu.pipeline_mode<synchronous>, transform_indices = @transform_1, window_bounds = array<i64: 128, 256>}, {pipeline_mode = #tpu.pipeline_mode<synchronous>, transform_indices = @transform_2, window_bounds = array<i64: 1, 256>}, {pipeline_mode = #tpu.pipeline_mode<synchronous>, transform_indices = @transform_3, window_bounds = array<i64: 256, 128>}, {pipeline_mode = #tpu.pipeline_mode<synchronous>, transform_indices = @transform_4, window_bounds = array<i64: 1, 128>}, {transform_indices = @transform_5, window_bounds = array<i64: 8, 128>}]} {
    %c0 = arith.constant 0 : index
    %c0_0 = arith.constant 0 : index
    %0 = vector.load %arg1[%c0, %c0_0] : memref<8x128xbf16, #tpu.memory_space<vmem>>, vector<8x128xbf16>
    %c0_1 = arith.constant 0 : index
    %c0_2 = arith.constant 0 : index
    %1 = vector.load %arg2[%c0_1, %c0_2] : memref<128x256xbf16, #tpu.memory_space<vmem>>, vector<128x256xbf16>
    %cst = arith.constant dense<0.000000e+00> : vector<8x256xf32>
    %2 = tpu.matmul %0, %1, %cst {dimension_numbers = #tpu.dot_dimension_numbers<[1], [0], [0], [1], [0, 0, 1, 1], [], []>} : vector<8x128xbf16>, vector<128x256xbf16>, vector<8x256xf32> -> vector<8x256xf32>
    %c0_3 = arith.constant 0 : index
    %c0_4 = arith.constant 0 : index
    %3 = vector.load %arg3[%c0_3, %c0_4] : memref<1x256xf32, #tpu.memory_space<vmem>>, vector<1x256xf32>
    %4 = vector.broadcast %3 : vector<1x256xf32> to vector<8x256xf32>
    %5 = arith.addf %2, %4 : vector<8x256xf32>
    %cst_5 = arith.constant 0.000000e+00 : f32
    %6 = vector.broadcast %cst_5 : f32 to vector<8x256xf32>
    %7 = arith.maximumf %5, %6 : vector<8x256xf32>
    %8 = arith.truncf %7 : vector<8x256xf32> to vector<8x256xbf16>
    %c0_6 = arith.constant 0 : index
    %c0_7 = arith.constant 0 : index
    %9 = vector.load %arg4[%c0_6, %c0_7] : memref<256x128xbf16, #tpu.memory_space<vmem>>, vector<256x128xbf16>
    %cst_8 = arith.constant dense<0.000000e+00> : vector<8x128xf32>
    %10 = tpu.matmul %8, %9, %cst_8 {dimension_numbers = #tpu.dot_dimension_numbers<[1], [0], [0], [1], [0, 0, 1, 1], [], []>} : vector<8x256xbf16>, vector<256x128xbf16>, vector<8x128xf32> -> vector<8x128xf32>
    %c0_9 = arith.constant 0 : index
    %c0_10 = arith.constant 0 : index
    %11 = vector.load %arg5[%c0_9, %c0_10] : memref<1x128xf32, #tpu.memory_space<vmem>>, vector<1x128xf32>
    %12 = vector.broadcast %11 : vector<1x128xf32> to vector<8x128xf32>
    %13 = arith.addf %10, %12 : vector<8x128xf32>
    %c0_11 = arith.constant 0 : index
    %c0_12 = arith.constant 0 : index
    %14 = vector.load %arg6[%c0_11, %c0_12] : memref<8x128xf32, #tpu.memory_space<vmem>>, vector<8x128xf32>
    tpu.vector_store %arg6[%c0_11, %c0_12], %13 {strides = array<i32>} : memref<8x128xf32, #tpu.memory_space<vmem>>, vector<8x128xf32>,
    return
  }
  func.func @transform_0(%arg0: i32) -> (i32, i32) {
    %c0_i32 = arith.constant 0 : i32
    %c0_i32_0 = arith.constant 0 : i32
    return %arg0, %c0_i32 : i32, i32
  }
  func.func @transform_1(%arg0: i32) -> (i32, i32) {
    %c0_i32 = arith.constant 0 : i32
    %c0_i32_0 = arith.constant 0 : i32
    %c0_i32_1 = arith.constant 0 : i32
    return %c0_i32, %c0_i32_0 : i32, i32
  }
  func.func @transform_2(%arg0: i32) -> (i32, i32) {
    %c0_i32 = arith.constant 0 : i32
    %c0_i32_0 = arith.constant 0 : i32
    %c0_i32_1 = arith.constant 0 : i32
    return %c0_i32, %c0_i32_0 : i32, i32
  }
  func.func @transform_3(%arg0: i32) -> (i32, i32) {
    %c0_i32 = arith.constant 0 : i32
    %c0_i32_0 = arith.constant 0 : i32
    %c0_i32_1 = arith.constant 0 : i32
    return %c0_i32, %c0_i32_0 : i32, i32
  }
  func.func @transform_4(%arg0: i32) -> (i32, i32) {
    %c0_i32 = arith.constant 0 : i32
    %c0_i32_0 = arith.constant 0 : i32
    %c0_i32_1 = arith.constant 0 : i32
    return %c0_i32, %c0_i32_0 : i32, i32
  }
  func.func @transform_5(%arg0: i32) -> (i32, i32) {
    %c0_i32 = arith.constant 0 : i32
    %c0_i32_0 = arith.constant 0 : i32
    return %arg0, %c0_i32 : i32, i32
  }
}

</mosaic_0001>

<llo_original>
// kernel: _ffn_forward_2d.1
$region0: #{_ffn_forward_2d.1}
  #allocation0 [shape = 'u32[]', space=smem, size = 0x4, offset = 0x4, fixed_abs, tag = 'smem constant byte address 0x4 - core index']
  #allocation1 [shape = 'u32[72,128]{1,0:T(1,128)}', space=vmem, size = 0x9000, scoped, tag = 'internal scratch']
  %s0 = inlined_call_operand.vmem [shape: bf16[16,128], index: 0, kind: input, shape index: {}]
  %s1 = inlined_call_operand.hbm [shape: bf16[128,256], index: 1, kind: input, shape index: {}]
  %s2 = inlined_call_operand.vmem [shape: f32[1,256], index: 2, kind: input, shape index: {}]
  %s3 = inlined_call_operand.hbm [shape: bf16[256,128], index: 3, kind: input, shape index: {}]
  %s4 = inlined_call_operand.vmem [shape: f32[1,128], index: 4, kind: input, shape index: {}]
  %s5 = inlined_call_operand.hbm [shape: f32[16,128], index: 5, kind: output, shape index: {}]
  %s6 = sld [smem:[#allocation0]]
  $region61: #{_ffn_forward_2d.1} parent=0
    _
  %s8 = ssub.s32 1, %s6
  %s9 = scalar_select 0, %s8, %s6
  $region1: #{_ffn_forward_2d.1} parent=0
    #allocation2 [shape = 'u8[65536]{0}', space=vmem, size = 0x10000, scoped, tag = 'input window, operand 1, single buffered']
    #allocation3 [shape = 's32[2]{0}', space=sflag, size = 0x8, scoped, tag = 'scoped memory for _ffn_forward_2d.1']
    #allocation4 [shape = 's32[2]{0}', space=sflag, size = 0x8, scoped, tag = 'scoped memory for _ffn_forward_2d.1']
    #allocation5 [shape = 'u8[65536]{0}', space=vmem, size = 0x10000, scoped, tag = 'input window, operand 3, single buffered']
    #allocation6 [shape = 's32[1]{0}', space=sflag, size = 0x4, scoped, tag = 'scoped memory for _ffn_forward_2d.1']
    #allocation7 [shape = 'u8[8192]{0}', space=vmem, size = 0x2000, scoped, tag = 'output window, operand 0']
    %10 = vsyncpa [#allocation3], 0
    %11 = vsyncpa [#allocation6], 0
    %12 = vsyncpa [#allocation4], 0
    %s13 = scalar_lea.sflag [#allocation4], 1
    %14 = vsyncpa %s13, 0
    loop: start=0, step=1, limit=4
    $region2: #{_ffn_forward_2d.1} parent=1 // loop_pre_header
      _
    $region3: #{_ffn_forward_2d.1} parent=1 // loop_header
      %s16 = sphi 0, %s20
      %p17 = scmp.ge.s32.totalorder %s16, 4
      %s26 = sphi 0, %s28
      %s29 = sphi 0, %s26
      %s30 = sphi 0, %s29
      %s46 = sphi 0, %s30
      %s50 = sphi 0, %s50
      %s52 = sphi 0, %s50
      %s53 = sphi 0, %s52
      %s67 = sphi 0, %s53
      %s71 = sphi 0, %s71
      %s73 = sphi 0, %s71
      %s74 = sphi 0, %s73
      %s88 = sphi 0, %s74
      %s92 = sphi 0, %s92
      %s94 = sphi 0, %s92
      %s95 = sphi 0, %s94
      %s109 = sphi 0, %s95
      %s113 = sphi 0, %s113
      %s115 = sphi 0, %s113
      %s116 = sphi 0, %s115
      %s130 = sphi 0, %s116
      %s136 = sphi 0, %s138
      %s139 = sphi 0, %s136
      %s140 = sphi 0, %s139
      %s156 = sphi 0, %s140
    $region4: #{_ffn_forward_2d.1} parent=1 // loop_header_branch
      %19 = sbr.rel (%p17) target = $region8
    $region5: #{_ffn_forward_2d.1} parent=1 // loop_body
      %s21 = ssub.s32 %s16, 1
      %s22 = ssub.s32 %s16, 2
      %s23 = sadd.s32 %s16, 1
      %s24 = ssub.s32 %s16, %s23
      %p25 = scmp.eq.s32.totalorder %s24, 0
      %s27 = sadd.s32 %s26, 1
      %s28 = scalar_select %p25, %s26, %s27
      %p31 = pneg %p25
      %p32 = scmp.eq.s32.totalorder %s16, 1
      %p33 = por %p31, %p32
      %p34 = scmp.ne.s32.totalorder %s26, %s29
      %p35 = scmp.eq.s32.totalorder %s16, 0
      %p36 = por %p34, %p35
      %p37 = scmp.ne.s32.totalorder %s26, %s29
      %p38 = scmp.eq.s32.totalorder %s21, 1
      %p39 = por %p37, %p38
      %p40 = scmp.ne.s32.totalorder %s29, %s30
      %p41 = scmp.eq.s32.totalorder %s21, 0
      %p42 = por %p40, %p41
      %p43 = scmp.ne.s32.totalorder %s29, %s30
      %p44 = scmp.eq.s32.totalorder %s22, 1
      %p45 = por %p43, %p44
      %p47 = scmp.ne.s32.totalorder %s30, %s46
      %p48 = scmp.eq.s32.totalorder %s22, 0
      %p49 = por %p47, %p48
      %s51 = sadd.s32 %s50, 1
      %p54 = scmp.eq.s32.totalorder %s16, 1
      %p55 = scmp.ne.s32.totalorder %s50, %s52
      %p56 = scmp.eq.s32.totalorder %s16, 0
      %p57 = por %p55, %p56
      %p58 = scmp.ne.s32.totalorder %s50, %s52
      %p59 = scmp.eq.s32.totalorder %s21, 1
      %p60 = por %p58, %p59
      %p61 = scmp.ne.s32.totalorder %s52, %s53
      %p62 = scmp.eq.s32.totalorder %s21, 0
      %p63 = por %p61, %p62
      %p64 = scmp.ne.s32.totalorder %s52, %s53
      %p65 = scmp.eq.s32.totalorder %s22, 1
      %p66 = por %p64, %p65
      %p68 = scmp.ne.s32.totalorder %s53, %s67
      %p69 = scmp.eq.s32.totalorder %s22, 0
      %p70 = por %p68, %p69
      %s72 = sadd.s32 %s71, 1
      %p75 = scmp.eq.s32.totalorder %s16, 1
      %p76 = scmp.ne.s32.totalorder %s71, %s73
      %p77 = scmp.eq.s32.totalorder %s16, 0
      %p78 = por %p76, %p77
      %p79 = scmp.ne.s32.totalorder %s71, %s73
      %p80 = scmp.eq.s32.totalorder %s21, 1
      %p81 = por %p79, %p80
      %p82 = scmp.ne.s32.totalorder %s73, %s74
      %p83 = scmp.eq.s32.totalorder %s21, 0
      %p84 = por %p82, %p83
      %p85 = scmp.ne.s32.totalorder %s73, %s74
      %p86 = scmp.eq.s32.totalorder %s22, 1
      %p87 = por %p85, %p86
      %p89 = scmp.ne.s32.totalorder %s74, %s88
      %p90 = scmp.eq.s32.totalorder %s22, 0
      %p91 = por %p89, %p90
      %s93 = sadd.s32 %s92, 1
      %p96 = scmp.eq.s32.totalorder %s16, 1
      %p97 = scmp.ne.s32.totalorder %s92, %s94
      %p98 = scmp.eq.s32.totalorder %s16, 0
      %p99 = por %p97, %p98
      %p100 = scmp.ne.s32.totalorder %s92, %s94
      %p101 = scmp.eq.s32.totalorder %s21, 1
      %p102 = por %p100, %p101
      %p103 = scmp.ne.s32.totalorder %s94, %s95
      %p104 = scmp.eq.s32.totalorder %s21, 0
      %p105 = por %p103, %p104
      %p106 = scmp.ne.s32.totalorder %s94, %s95
      %p107 = scmp.eq.s32.totalorder %s22, 1
      %p108 = por %p106, %p107
      %p110 = scmp.ne.s32.totalorder %s95, %s109
      %p111 = scmp.eq.s32.totalorder %s22, 0
      %p112 = por %p110, %p111
      %s114 = sadd.s32 %s113, 1
      %p117 = scmp.eq.s32.totalorder %s16, 1
      %p118 = scmp.ne.s32.totalorder %s113, %s115
      %p119 = scmp.eq.s32.totalorder %s16, 0
      %p120 = por %p118, %p119
      %p121 = scmp.ne.s32.totalorder %s113, %s115
      %p122 = scmp.eq.s32.totalorder %s21, 1
      %p123 = por %p121, %p122
      %p124 = scmp.ne.s32.totalorder %s115, %s116
      %p125 = scmp.eq.s32.totalorder %s21, 0
      %p126 = por %p124, %p125
      %p127 = scmp.ne.s32.totalorder %s115, %s116
      %p128 = scmp.eq.s32.totalorder %s22, 1
      %p129 = por %p127, %p128
      %p131 = scmp.ne.s32.totalorder %s116, %s130
      %p132 = scmp.eq.s32.totalorder %s22, 0
      %p133 = por %p131, %p132
      %s134 = ssub.s32 %s16, %s23
      %p135 = scmp.eq.s32.totalorder %s134, 0
      %s137 = sadd.s32 %s136, 1
      %s138 = scalar_select %p135, %s136, %s137
      %p141 = pneg %p135
      %p142 = scmp.eq.s32.totalorder %s16, 1
      %p143 = por %p141, %p142
      %p144 = scmp.ne.s32.totalorder %s136, %s139
      %p145 = scmp.eq.s32.totalorder %s16, 0
      %p146 = por %p144, %p145
      %p147 = scmp.ne.s32.totalorder %s136, %s139
      %p148 = scmp.eq.s32.totalorder %s21, 1
      %p149 = por %p147, %p148
      %p150 = scmp.ne.s32.totalorder %s139, %s140
      %p151 = scmp.eq.s32.totalorder %s21, 0
      %p152 = por %p150, %p151
      %p153 = scmp.ne.s32.totalorder %s139, %s140
      %p154 = scmp.eq.s32.totalorder %s22, 1
      %p155 = por %p153, %p154
      %p157 = scmp.ne.s32.totalorder %s140, %s156
      %p158 = scmp.eq.s32.totalorder %s22, 0
      %p159 = por %p157, %p158
      %p160 = scmp.le.s32.totalorder 1, %s16
      %p161 = scmp.lt.s32.totalorder %s16, 3
      %p162 = pnand %p160, %p161
      %p163 = pneg %p162
      // Predicated region
      $region9: #{_ffn_forward_2d.1} parent=5 // pred_check
        _
      $region10: #{_ffn_forward_2d.1} parent=5 // pred_check_branch
        %165 = sbr.rel (%p162) target = $region12
      $region11: #{_ffn_forward_2d.1} parent=5 // pred_region
        %s166 = ssub.s32 %s16, 1
        // Predicated region
        $region13: #{_ffn_forward_2d.1} parent=11 // pred_check
          %p167 = pneg %p63
        $region14: #{_ffn_forward_2d.1} parent=11 // pred_check_branch
          %169 = sbr.rel (%p167) target = $region16
        $region15: #{_ffn_forward_2d.1} parent=11 // pred_region
          %171 = vsyncadd [#allocation3], 0
          %s172 = sshll.u32 %s1, 4
          %s173 = int_to_ptr.hbm [resolvable:$true] %s172
          %s174 = sshll.u32 [#allocation2], 4
          %s175 = int_to_ptr.vmem [resolvable:$true] %s174
          %180 = dma.hbm_to_vmem [thread:$0]  %s173, 2048, %s175, [#allocation3], 128, 128, 8
        $region16: #{_ffn_forward_2d.1} parent=11 // pred_fallthru
          _
        // Predicated region
        $region17: #{_ffn_forward_2d.1} parent=11 // pred_check
          %p181 = pneg %p84
        $region18: #{_ffn_forward_2d.1} parent=11 // pred_check_branch
          %183 = sbr.rel (%p181) target = $region20
        $region19: #{_ffn_forward_2d.1} parent=11 // pred_region
          _
        $region20: #{_ffn_forward_2d.1} parent=11 // pred_fallthru
          _
        // Predicated region
        $region21: #{_ffn_forward_2d.1} parent=11 // pred_check
          %p184 = pneg %p105
        $region22: #{_ffn_forward_2d.1} parent=11 // pred_check_branch
          %186 = sbr.rel (%p184) target = $region24
        $region23: #{_ffn_forward_2d.1} parent=11 // pred_region
          %188 = vsyncadd [#allocation6], 0
          %s189 = sshll.u32 %s3, 4
          %s190 = int_to_ptr.hbm [resolvable:$true] %s189
          %s191 = sshll.u32 [#allocation5], 4
          %s192 = int_to_ptr.vmem [resolvable:$true] %s191
          %197 = dma.hbm_to_vmem [thread:$0]  %s190, 2048, %s192, [#allocation6], 64, 64, 4
        $region24: #{_ffn_forward_2d.1} parent=11 // pred_fallthru
          _
        // Predicated region
        $region25: #{_ffn_forward_2d.1} parent=11 // pred_check
          %p198 = pneg %p126
        $region26: #{_ffn_forward_2d.1} parent=11 // pred_check_branch
          %200 = sbr.rel (%p198) target = $region28
        $region27: #{_ffn_forward_2d.1} parent=11 // pred_region
          _
        $region28: #{_ffn_forward_2d.1} parent=11 // pred_fallthru
          _
      $region12: #{_ffn_forward_2d.1} parent=5 // pred_fallthru
        _
      %p201 = scmp.lt.s32.totalorder %s16, 2
      // Predicated region
      $region29: #{_ffn_forward_2d.1} parent=5 // pred_check
        %p202 = pneg %p201
      $region30: #{_ffn_forward_2d.1} parent=5 // pred_check_branch
        %204 = sbr.rel (%p202) target = $region32
      $region31: #{_ffn_forward_2d.1} parent=5 // pred_region
        // Predicated region
        $region33: #{_ffn_forward_2d.1} parent=31 // pred_check
          %p205 = pneg %p36
        $region34: #{_ffn_forward_2d.1} parent=31 // pred_check_branch
          %207 = sbr.rel (%p205) target = $region36
        $region35: #{_ffn_forward_2d.1} parent=31 // pred_region
          %p208 = scmp.lt.s32.totalorder %s16, 1
          %s209 = scalar_select %p208, %s16, 1
          %s210 = smul.addr %s209, 4
          %s211 = scalar_lea.vmem %s0, %s210
        $region36: #{_ffn_forward_2d.1} parent=31 // pred_fallthru
          _
      $region32: #{_ffn_forward_2d.1} parent=5 // pred_fallthru
        _
      %p212 = scmp.le.s32.totalorder 1, %s16
      %p213 = scmp.lt.s32.totalorder %s16, 3
      %p214 = pnand %p212, %p213
      %p215 = pneg %p214
      // Predicated region
      $region37: #{_ffn_forward_2d.1} parent=5 // pred_check
        _
      $region38: #{_ffn_forward_2d.1} parent=5 // pred_check_branch
        %217 = sbr.rel (%p214) target = $region40
      $region39: #{_ffn_forward_2d.1} parent=5 // pred_region
        %s218 = ssub.s32 %s16, 1
        // Predicated region
        $region41: #{_ffn_forward_2d.1} parent=39 // pred_check
          %p219 = pneg %p63
        $region42: #{_ffn_forward_2d.1} parent=39 // pred_check_branch
          %221 = sbr.rel (%p219) target = $region44
        $region43: #{_ffn_forward_2d.1} parent=39 // pred_region
          %223 = dma.done [#allocation3], 2048
        $region44: #{_ffn_forward_2d.1} parent=39 // pred_fallthru
          _
        // Predicated region
        $region45: #{_ffn_forward_2d.1} parent=39 // pred_check
          %p224 = pneg %p105
        $region46: #{_ffn_forward_2d.1} parent=39 // pred_check_branch
          %226 = sbr.rel (%p224) target = $region48
        $region47: #{_ffn_forward_2d.1} parent=39 // pred_region
          %228 = dma.done [#allocation6], 2048
        $region48: #{_ffn_forward_2d.1} parent=39 // pred_fallthru
          _
        %p229 = scmp.lt.s32.totalorder %s21, 1
        %s230 = scalar_select %p229, %s21, 1
        %s231 = smul.addr %s230, 4
        %s232 = scalar_lea.vmem %s0, %s231
        %p233 = pneg %p42
        %p234 = pneg %p39
        %p235 = pneg %p63
        %p236 = pneg %p60
        %p237 = pneg %p84
        %p238 = pneg %p81
        %p239 = pneg %p105
        %p240 = pneg %p102
        %p241 = pneg %p126
        %p242 = pneg %p123
        %p243 = pneg %p152
        %p244 = pneg %p149
        %s245 = sand.u32 %s139, 1
        %s246 = scalar_lea.sflag [#allocation4], %s245
        %s247 = sand.u32 %s139, 1
        %s248 = smul.addr %s247, 8
        %s249 = scalar_lea.vmem [#allocation7], %s248
        %p250 = scmp.lt.s32.totalorder %s21, 1
        %s251 = scalar_select %p250, %s21, 1
        %s252 = smul.addr %s251, 4
        %s253 = scalar_lea.vmem %s0, %s252
        %v254 = vld [vmem:[%s253] sm:$0xf]
        %v255 = vld [vmem:[#allocation2] sm:$0xff]
        %v256 = vld [vmem:[#allocation2 + $0x8] sm:$0xff]
        %v257 = vld [vmem:[#allocation2 + $0x10] sm:$0xff]
        %v258 = vld [vmem:[#allocation2 + $0x18] sm:$0xff]
        %v259 = vld [vmem:[#allocation2 + $0x20] sm:$0xff]
        %v260 = vld [vmem:[#allocation2 + $0x28] sm:$0xff]
        %v261 = vld [vmem:[#allocation2 + $0x30] sm:$0xff]
        %v262 = vld [vmem:[#allocation2 + $0x38] sm:$0xff]
        %v263 = vld [vmem:[#allocation2 + $0x40] sm:$0xff]
        %v264 = vld [vmem:[#allocation2 + $0x48] sm:$0xff]
        %v265 = vld [vmem:[#allocation2 + $0x50] sm:$0xff]
        %v266 = vld [vmem:[#allocation2 + $0x58] sm:$0xff]
        %v267 = vld [vmem:[#allocation2 + $0x60] sm:$0xff]
        %v268 = vld [vmem:[#allocation2 + $0x68] sm:$0xff]
        %v269 = vld [vmem:[#allocation2 + $0x70] sm:$0xff]
        %v270 = vld [vmem:[#allocation2 + $0x78] sm:$0xff]
        %v271 = vld [vmem:[%s2] sm:$0x3]
        %v273 = vperm.slane %v271, 0
        %v274 = vperm.slane %v271, 1
        %v293 = vunpack.c.l.b16 %v255
        %v294 = vunpack.c.h.b16 %v255
        %v295 = vunpack.c.l.b16 %v256
        %v296 = vunpack.c.h.b16 %v256
        %v297 = vunpack.c.l.b16 %v257
        %v298 = vunpack.c.h.b16 %v257
        %v299 = vunpack.c.l.b16 %v258
        %v300 = vunpack.c.h.b16 %v258
        %v301 = vunpack.c.l.b16 %v259
        %v302 = vunpack.c.h.b16 %v259
        %v303 = vunpack.c.l.b16 %v260
        %v304 = vunpack.c.h.b16 %v260
        %v305 = vunpack.c.l.b16 %v261
        %v306 = vunpack.c.h.b16 %v261
        %v307 = vunpack.c.l.b16 %v262
        %v308 = vunpack.c.h.b16 %v262
        %v309 = vunpack.c.l.b16 %v263
        %v310 = vunpack.c.h.b16 %v263
        %v311 = vunpack.c.l.b16 %v264
        %v312 = vunpack.c.h.b16 %v264
        %v313 = vunpack.c.l.b16 %v265
        %v314 = vunpack.c.h.b16 %v265
        %v315 = vunpack.c.l.b16 %v266
        %v316 = vunpack.c.h.b16 %v266
        %v317 = vunpack.c.l.b16 %v267
        %v318 = vunpack.c.h.b16 %v267
        %v319 = vunpack.c.l.b16 %v268
        %v320 = vunpack.c.h.b16 %v268
        %v321 = vunpack.c.l.b16 %v269
        %v322 = vunpack.c.h.b16 %v269
        %v323 = vunpack.c.l.b16 %v270
        %v324 = vunpack.c.h.b16 %v270
        %v325 = vpack.c.b16 %v295, %v293
        %v326 = vpack.c.b16 %v296, %v294
        %v327 = vpack.c.b16 %v299, %v297
        %v328 = vpack.c.b16 %v300, %v298
        %v329 = vpack.c.b16 %v303, %v301
        %v330 = vpack.c.b16 %v304, %v302
        %v331 = vpack.c.b16 %v307, %v305
        %v332 = vpack.c.b16 %v308, %v306
        %v333 = vpack.c.b16 %v311, %v309
        %v334 = vpack.c.b16 %v312, %v310
        %v335 = vpack.c.b16 %v315, %v313
        %v336 = vpack.c.b16 %v316, %v314
        %v337 = vpack.c.b16 %v319, %v317
        %v338 = vpack.c.b16 %v320, %v318
        %v339 = vpack.c.b16 %v323, %v321
        %v340 = vpack.c.b16 %v324, %v322
        %357 = vmatpush.bf16.msra.mxu0 %v339
        %358 = vmatpush.bf16.msra.mxu0 %v337
        %359 = vmatpush.bf16.msra.mxu0 %v335
        %360 = vmatpush.bf16.msra.mxu0 %v333
        %361 = vmatpush.bf16.msra.mxu0 %v331
        %362 = vmatpush.bf16.msra.mxu0 %v329
        %363 = vmatpush.bf16.msra.mxu0 %v327
        %364 = vmatpush.bf16.msra.mxu0 %v325
        %365 = vmatmul.bf16.gmra.mxu0 %v254
        %v366 = vpop.f32.mrf.mxu0
        %v367 = vadd.f32 %v273, %v366
        %v368 = vpop.f32.mrf.mxu0
        %369 = vdwg.mxu0
        %370 = vmatpush.bf16.msra.mxu0 %v340
        %371 = vmatpush.bf16.msra.mxu0 %v338
        %372 = vmatpush.bf16.msra.mxu0 %v336
        %373 = vmatpush.bf16.msra.mxu0 %v334
        %374 = vmatpush.bf16.msra.mxu0 %v332
        %375 = vmatpush.bf16.msra.mxu0 %v330
        %376 = vmatpush.bf16.msra.mxu0 %v328
        %377 = vmatpush.bf16.msra.mxu0 %v326
        %378 = vmatmul.bf16.gmra.mxu0 %v254
        %v379 = vpop.f32.mrf.mxu0
        %v380 = vadd.f32 %v274, %v379
        %v381 = vpop.f32.mrf.mxu0
        %382 = vdwg.mxu0
        %v383 = vmax.f32 %v367, 0.0
        %v384 = vmax.f32 %v380, 0.0
        %v385 = vpack.c.bf16 %v383, %v383
        %v386 = vpack.c.bf16 %v384, %v384
        %v387 = vld [vmem:[#allocation5] sm:$0xf]
        %v388 = vld [vmem:[#allocation5 + $0x4] sm:$0xf]
        %v389 = vld [vmem:[#allocation5 + $0x8] sm:$0xf]
        %v390 = vld [vmem:[#allocation5 + $0xc] sm:$0xf]
        %v391 = vld [vmem:[#allocation5 + $0x10] sm:$0xf]
        %v392 = vld [vmem:[#allocation5 + $0x14] sm:$0xf]
        %v393 = vld [vmem:[#allocation5 + $0x18] sm:$0xf]
        %v394 = vld [vmem:[#allocation5 + $0x1c] sm:$0xf]
        %v395 = vld [vmem:[#allocation5 + $0x20] sm:$0xf]
        %v396 = vld [vmem:[#allocation5 + $0x24] sm:$0xf]
        %v397 = vld [vmem:[#allocation5 + $0x28] sm:$0xf]
        %v398 = vld [vmem:[#allocation5 + $0x2c] sm:$0xf]
        %v399 = vld [vmem:[#allocation5 + $0x30] sm:$0xf]
        %v400 = vld [vmem:[#allocation5 + $0x34] sm:$0xf]
        %v401 = vld [vmem:[#allocation5 + $0x38] sm:$0xf]
        %v402 = vld [vmem:[#allocation5 + $0x3c] sm:$0xf]
        %v403 = vld [vmem:[#allocation5 + $0x40] sm:$0xf]
        %v404 = vld [vmem:[#allocation5 + $0x44] sm:$0xf]
        %v405 = vld [vmem:[#allocation5 + $0x48] sm:$0xf]
        %v406 = vld [vmem:[#allocation5 + $0x4c] sm:$0xf]
        %v407 = vld [vmem:[#allocation5 + $0x50] sm:$0xf]
        %v408 = vld [vmem:[#allocation5 + $0x54] sm:$0xf]
        %v409 = vld [vmem:[#allocation5 + $0x58] sm:$0xf]
        %v410 = vld [vmem:[#allocation5 + $0x5c] sm:$0xf]
        %v411 = vld [vmem:[#allocation5 + $0x60] sm:$0xf]
        %v412 = vld [vmem:[#allocation5 + $0x64] sm:$0xf]
        %v413 = vld [vmem:[#allocation5 + $0x68] sm:$0xf]
        %v414 = vld [vmem:[#allocation5 + $0x6c] sm:$0xf]
        %v415 = vld [vmem:[#allocation5 + $0x70] sm:$0xf]
        %v416 = vld [vmem:[#allocation5 + $0x74] sm:$0xf]
        %v417 = vld [vmem:[#allocation5 + $0x78] sm:$0xf]
        %v418 = vld [vmem:[#allocation5 + $0x7c] sm:$0xf]
        %v419 = vld [vmem:[%s4] sm:$0x1]
        %v421 = vperm.slane %v419, 0
        %v455 = vunpack.c.l.b16 %v387
        %v456 = vunpack.c.l.b16 %v388
        %v457 = vunpack.c.l.b16 %v389
        %v458 = vunpack.c.l.b16 %v390
        %v459 = vunpack.c.l.b16 %v391
        %v460 = vunpack.c.l.b16 %v392
        %v461 = vunpack.c.l.b16 %v393
        %v462 = vunpack.c.l.b16 %v394
        %v463 = vunpack.c.l.b16 %v395
        %v464 = vunpack.c.l.b16 %v396
        %v465 = vunpack.c.l.b16 %v397
        %v466 = vunpack.c.l.b16 %v398
        %v467 = vunpack.c.l.b16 %v399
        %v468 = vunpack.c.l.b16 %v400
        %v469 = vunpack.c.l.b16 %v401
        %v470 = vunpack.c.l.b16 %v402
        %v471 = vunpack.c.l.b16 %v403
        %v472 = vunpack.c.l.b16 %v404
        %v473 = vunpack.c.l.b16 %v405
        %v474 = vunpack.c.l.b16 %v406
        %v475 = vunpack.c.l.b16 %v407
        %v476 = vunpack.c.l.b16 %v408
        %v477 = vunpack.c.l.b16 %v409
        %v478 = vunpack.c.l.b16 %v410
        %v479 = vunpack.c.l.b16 %v411
        %v480 = vunpack.c.l.b16 %v412
        %v481 = vunpack.c.l.b16 %v413
        %v482 = vunpack.c.l.b16 %v414
        %v483 = vunpack.c.l.b16 %v415
        %v484 = vunpack.c.l.b16 %v416
        %v485 = vunpack.c.l.b16 %v417
        %v486 = vunpack.c.l.b16 %v418
        %v487 = vpack.c.b16 %v456, %v455
        %v488 = vpack.c.b16 %v458, %v457
        %v489 = vpack.c.b16 %v460, %v459
        %v490 = vpack.c.b16 %v462, %v461
        %v491 = vpack.c.b16 %v464, %v463
        %v492 = vpack.c.b16 %v466, %v465
        %v493 = vpack.c.b16 %v468, %v467
        %v494 = vpack.c.b16 %v470, %v469
        %v495 = vpack.c.b16 %v472, %v471
        %v496 = vpack.c.b16 %v474, %v473
        %v497 = vpack.c.b16 %v476, %v475
        %v498 = vpack.c.b16 %v478, %v477
        %v499 = vpack.c.b16 %v480, %v479
        %v500 = vpack.c.b16 %v482, %v481
        %v501 = vpack.c.b16 %v484, %v483
        %v502 = vpack.c.b16 %v486, %v485
        %519 = vmatpush.bf16.msra.mxu0 %v494
        %520 = vmatpush.bf16.msra.mxu0 %v493
        %521 = vmatpush.bf16.msra.mxu0 %v492
        %522 = vmatpush.bf16.msra.mxu0 %v491
        %523 = vmatpush.bf16.msra.mxu0 %v490
        %524 = vmatpush.bf16.msra.mxu0 %v489
        %525 = vmatpush.bf16.msra.mxu0 %v488
        %526 = vmatpush.bf16.msra.mxu0 %v487
        %527 = vmatmul.bf16.gmra.mxu0 %v385
        %v528 = vpop.f32.mrf.mxu0
        %v529 = vadd.f32 %v421, %v528
        %v530 = vpop.f32.mrf.mxu0
        %531 = vdwg.mxu0
        %532 = vmatpush.bf16.msra.mxu0 %v502
        %533 = vmatpush.bf16.msra.mxu0 %v501
        %534 = vmatpush.bf16.msra.mxu0 %v500
        %535 = vmatpush.bf16.msra.mxu0 %v499
        %536 = vmatpush.bf16.msra.mxu0 %v498
        %537 = vmatpush.bf16.msra.mxu0 %v497
        %538 = vmatpush.bf16.msra.mxu0 %v496
        %539 = vmatpush.bf16.msra.mxu0 %v495
        %540 = vmatmul.bf16.gmra.mxu0 %v386
        %v541 = vpop.f32.mrf.mxu0
        %v542 = vadd.f32 %v529, %v541
        %v543 = vpop.f32.mrf.mxu0
        %544 = vdwg.mxu0
        %545 = vst [vmem:[%s249] sm:$0xff] %v542
        %s546 = sand.u32 %s139, 1
        %s547 = scalar_lea.sflag [#allocation4], %s546
        %s548 = sand.u32 %s139, 1
        %s549 = smul.addr %s548, 8
        %s550 = scalar_lea.vmem [#allocation7], %s549
        // Predicated region
        $region49: #{_ffn_forward_2d.1} parent=39 // pred_check
          %p551 = pneg %p149
        $region50: #{_ffn_forward_2d.1} parent=39 // pred_check_branch
          %553 = sbr.rel (%p551) target = $region52
        $region51: #{_ffn_forward_2d.1} parent=39 // pred_region
          %555 = vsyncadd %s547, 0
          %s556 = smul.addr %s21, 8
          %s557 = scalar_lea.hbm %s5, %s556
          %s559 = sshll.u32 %s550, 4
          %s560 = int_to_ptr.vmem [resolvable:$true] %s559
          %s561 = sshll.u32 %s557, 4
          %s562 = int_to_ptr.hbm [resolvable:$true] %s561
          %564 = dma.vmem_to_hbm [thread:$0]  %s560, 128, %s562, %s547
        $region52: #{_ffn_forward_2d.1} parent=39 // pred_fallthru
          _
      $region40: #{_ffn_forward_2d.1} parent=5 // pred_fallthru
        _
      %p565 = scmp.le.s32.totalorder 2, %s16
      // Predicated region
      $region53: #{_ffn_forward_2d.1} parent=5 // pred_check
        %p566 = pneg %p565
      $region54: #{_ffn_forward_2d.1} parent=5 // pred_check_branch
        %568 = sbr.rel (%p566) target = $region56
      $region55: #{_ffn_forward_2d.1} parent=5 // pred_region
        %s569 = ssub.s32 %s16, 2
        // Predicated region
        $region57: #{_ffn_forward_2d.1} parent=55 // pred_check
          %p570 = pneg %p155
        $region58: #{_ffn_forward_2d.1} parent=55 // pred_check_branch
          %572 = sbr.rel (%p570) target = $region60
        $region59: #{_ffn_forward_2d.1} parent=55 // pred_region
          %s573 = sand.u32 %s140, 1
          %s574 = scalar_lea.sflag [#allocation4], %s573
          %s575 = sand.u32 %s140, 1
          %s576 = smul.addr %s575, 8
          %s577 = scalar_lea.vmem [#allocation7], %s576
          %579 = dma.done %s574, 128
        $region60: #{_ffn_forward_2d.1} parent=55 // pred_fallthru
          _
      $region56: #{_ffn_forward_2d.1} parent=5 // pred_fallthru
        _
    $region6: #{_ffn_forward_2d.1} parent=1 // loop_footer
      %s20 = sadd.s32 1, %s16
    $region7: #{_ffn_forward_2d.1} parent=1 // loop_footer_branch
      %15 = sbr.rel target = $region3
    $region8: #{_ffn_forward_2d.1} parent=1 // loop_exit
      _
    %580 = vsyncpa [#allocation3], 1
    %s581 = scalar_lea.sflag [#allocation3], 1
    %582 = vsyncpa %s581, 1
    %583 = vsyncpa [#allocation6], 1
    %584 = vsyncpa [#allocation4], 1
    %s585 = scalar_lea.sflag [#allocation4], 1
    %586 = vsyncpa %s585, 1

</llo_original>
